<compile_context>
chip_gen: v6e
topology: v6e:2x2x1
jax: 0.10.0
libtpu: 0.0.40
codegen_flags: <defaults>
</compile_context>

<pallas_src>
import jax
import jax.numpy as jnp
from jax.experimental import pallas as pl
from jax.experimental.pallas import tpu as pltpu

LANE = 128
SUBLANE = 8
VMEM_BUDGET_BYTES = 24 * 1024 * 1024   # stay under the 32 MiB scoped default


def _round_up(x, m):
    return ((x + m - 1) // m) * m


def mlp4_kernel(x_ref,
                w1_ref, b1_ref,
                w2_ref, b2_ref,
                w3_ref, b3_ref,
                w4_ref, b4_ref,
                o_ref):
    # x / weights are in the MXU compute dtype (bf16 by default); all matmuls
    # accumulate in f32 and the bias-add / ReLU happen in f32 on the VPU.
    cdt = x_ref.dtype
    x = x_ref[...]

    h = jnp.dot(x, w1_ref[...], preferred_element_type=jnp.float32) + b1_ref[...]
    h = jnp.maximum(h, 0.0).astype(cdt)

    h = jnp.dot(h, w2_ref[...], preferred_element_type=jnp.float32) + b2_ref[...]
    h = jnp.maximum(h, 0.0).astype(cdt)

    h = jnp.dot(h, w3_ref[...], preferred_element_type=jnp.float32) + b3_ref[...]
    h = jnp.maximum(h, 0.0).astype(cdt)

    out = jnp.dot(h, w4_ref[...], preferred_element_type=jnp.float32) + b4_ref[...]
    o_ref[...] = out.astype(o_ref.dtype)


def _pick_batch_tile(B, in_dim, out_pad, hidden_dims, cbytes, batch_tile):
    """Largest TB (multiple of 8, <= batch_tile) whose double-buffered tiles +
    resident weights fit in the VMEM budget."""
    h1, h2, h3 = hidden_dims
    resident = (in_dim * h1 + h1 * h2 + h2 * h3 + h3 * out_pad) * cbytes \
        + (h1 + h2 + h3 + out_pad) * 4                      # weights + f32 biases
    # per-row cost: x tile (cdt, double-buffered) + out tile (f32, double-buffered)
    per_row = 2 * in_dim * cbytes + 2 * out_pad * 4
    tb_max = max(SUBLANE, (VMEM_BUDGET_BYTES - resident) // max(per_row, 1))
    tb = min(batch_tile, _round_up(B, SUBLANE), (tb_max // SUBLANE) * SUBLANE)
    return max(SUBLANE, _round_up(tb, SUBLANE) if tb % SUBLANE else tb)


def mlp4_forward(x, params, *, compute_dtype=jnp.bfloat16, batch_tile=2048):
    """x: [B, input_dim] f32.  Weights are [in, out], biases [1, out] (f32)."""
    B, in_dim = x.shape
    h1, h2, h3 = params["w1"].shape[1], params["w2"].shape[1], params["w3"].shape[1]
    out_dim = params["w4"].shape[1]
    out_pad = _round_up(out_dim, LANE)            # lane-dense output writeback
    cbytes = jnp.dtype(compute_dtype).itemsize

    tb = _pick_batch_tile(B, in_dim, out_pad, (h1, h2, h3), cbytes, batch_tile)
    b_pad = _round_up(B, tb)

    x_p = x.astype(compute_dtype)
    if b_pad != B:
        x_p = jnp.pad(x_p, ((0, b_pad - B), (0, 0)))

    # Weights in MXU dtype; biases stay f32 (added to f32 accumulators).
    w1 = params["w1"].astype(compute_dtype)
    w2 = params["w2"].astype(compute_dtype)
    w3 = params["w3"].astype(compute_dtype)
    w4 = params["w4"].astype(compute_dtype)
    b1 = params["b1"].astype(jnp.float32)
    b2 = params["b2"].astype(jnp.float32)
    b3 = params["b3"].astype(jnp.float32)
    b4 = params["b4"].astype(jnp.float32)
    if out_pad != out_dim:
        w4 = jnp.pad(w4, ((0, 0), (0, out_pad - out_dim)))
        b4 = jnp.pad(b4, ((0, 0), (0, out_pad - out_dim)))

    grid = (b_pad // tb,)

    def _resident(arr):
        # Constant block index across the grid -> loaded once, stays in VMEM.
        return pl.BlockSpec(arr.shape, lambda i: (0, 0))

    in_specs = [
        pl.BlockSpec((tb, in_dim), lambda i: (i, 0)),   # x: streamed per tile
        _resident(w1), _resident(b1),
        _resident(w2), _resident(b2),
        _resident(w3), _resident(b3),
        _resident(w4), _resident(b4),
    ]
    out_specs = pl.BlockSpec((tb, out_pad), lambda i: (i, 0))

    flops = 2 * b_pad * (in_dim * h1 + h1 * h2 + h2 * h3 + h3 * out_pad)
    bytes_accessed = (b_pad * in_dim * cbytes                                   # x
                      + (in_dim * h1 + h1 * h2 + h2 * h3 + h3 * out_pad) * cbytes  # W
                      + (h1 + h2 + h3 + out_pad) * 4                            # biases
                      + b_pad * out_pad * 4)                                    # out
    cost = pl.CostEstimate(flops=int(flops), transcendentals=0,
                           bytes_accessed=int(bytes_accessed))

    out = pl.pallas_call(
        mlp4_kernel,
        out_shape=jax.ShapeDtypeStruct((b_pad, out_pad), jnp.float32),
        grid=grid,
        in_specs=in_specs,
        out_specs=out_specs,
        compiler_params=pltpu.CompilerParams(
            dimension_semantics=("parallel",),
            vmem_limit_bytes=32 * 1024 * 1024,
        ),
        cost_estimate=cost,
    )(x_p, w1, b1, w2, b2, w3, b3, w4, b4)

    return out[:B, :out_dim]


def classification_host_forward(x, params, **kw):
    """ClassificationModelHostTrainable.forward: z = local_model(x).flatten(1)."""
    z = mlp4_forward(x, params, **kw)
    return z.reshape(z.shape[0], -1)   # flatten(start_dim=1): no-op on 2-D z
# TODO(synk): get_prediction (torch.cat(z_list, dim=1) + classifier_head) is not
# part of forward() and is not implemented as a kernel.


def init_mlp4_params(key, input_dim, output_dim):
    """Deterministic init mimicking nn.Linear's U(-1/sqrt(fan_in), 1/sqrt(fan_in))."""
    dims = [(input_dim, 64), (64, 128), (128, 64), (64, output_dim)]
    params = {}
    for i, (fan_in, fan_out) in enumerate(dims, start=1):
        key, kw_, kb = jax.random.split(key, 3)
        bound = 1.0 / jnp.sqrt(jnp.float32(fan_in))
        params[f"w{i}"] = jax.random.uniform(
            kw_, (fan_in, fan_out), jnp.float32, minval=-bound, maxval=bound)
        params[f"b{i}"] = jax.random.uniform(
            kb, (1, fan_out), jnp.float32, minval=-bound, maxval=bound)
    return params


def mlp4_reference(x, params):
    h = x
    for i in range(1, 4):
        h = jnp.maximum(h @ params[f"w{i}"] + params[f"b{i}"], 0.0)
    return h @ params["w4"] + params["b4"]


if __name__ == "__main__":
    key = jax.random.PRNGKey(0)
    k_x, k_p = jax.random.split(key)

    batch, input_dim, output_dim = 8, 32, 16
    x = jax.random.normal(k_x, (batch, input_dim), jnp.float32)
    params = init_mlp4_params(k_p, input_dim, output_dim)

    ref = mlp4_reference(x, params)

    # f32 compute path: must match the reference tightly.
    out_f32 = jax.block_until_ready(
        classification_host_forward(x, params, compute_dtype=jnp.float32))
    assert out_f32.shape == (batch, output_dim)
    assert jnp.allclose(out_f32, ref, atol=1e-5, rtol=1e-5)

    # Default bf16-MXU / f32-accumulate path: looser tolerance for bf16 operands.
    out_bf16 = jax.block_until_ready(classification_host_forward(x, params))
    assert out_bf16.shape == (batch, output_dim)
    assert jnp.allclose(out_bf16, ref, atol=5e-2, rtol=5e-2)

    # Non-divisible / multi-tile batch exercises grid > 1 and row padding.
    big = jax.random.normal(k_x, (1000, input_dim), jnp.float32)
    out_big = jax.block_until_ready(
        classification_host_forward(big, params, compute_dtype=jnp.float32,
                                    batch_tile=256))
    assert out_big.shape == (1000, output_dim)
    assert jnp.allclose(out_big, mlp4_reference(big, params), atol=1e-4, rtol=1e-4)

    print("KERNEL_OK")
</pallas_src>

<mosaic_0001>
module attributes {stable_mosaic.version = 11 : i64} {
  func.func @mlp4_kernel(%arg0: i32, %arg1: memref<8x32xf32, #tpu.memory_space<vmem>>, %arg2: memref<32x64xf32, #tpu.memory_space<vmem>>, %arg3: memref<1x64xf32, #tpu.memory_space<vmem>>, %arg4: memref<64x128xf32, #tpu.memory_space<vmem>>, %arg5: memref<1x128xf32, #tpu.memory_space<vmem>>, %arg6: memref<128x64xf32, #tpu.memory_space<vmem>>, %arg7: memref<1x64xf32, #tpu.memory_space<vmem>>, %arg8: memref<64x128xf32, #tpu.memory_space<vmem>>, %arg9: memref<1x128xf32, #tpu.memory_space<vmem>>, %arg10: memref<8x128xf32, #tpu.memory_space<vmem>>) attributes {dimension_semantics = [#tpu.dimension_semantics<parallel>], iteration_bounds = array<i64: 1>, scalar_prefetch = 0 : i64, scratch_operands = 0 : i64, tpu.core_type = #tpu.core_type<tc>, window_params = [{transform_indices = @transform_0, window_bounds = array<i64: 8, 32>}, {pipeline_mode = #tpu.pipeline_mode<synchronous>, transform_indices = @transform_1, window_bounds = array<i64: 32, 64>}, {pipeline_mode = #tpu.pipeline_mode<synchronous>, transform_indices = @transform_2, window_bounds = array<i64: 1, 64>}, {pipeline_mode = #tpu.pipeline_mode<synchronous>, transform_indices = @transform_3, window_bounds = array<i64: 64, 128>}, {pipeline_mode = #tpu.pipeline_mode<synchronous>, transform_indices = @transform_4, window_bounds = array<i64: 1, 128>}, {pipeline_mode = #tpu.pipeline_mode<synchronous>, transform_indices = @transform_5, window_bounds = array<i64: 128, 64>}, {pipeline_mode = #tpu.pipeline_mode<synchronous>, transform_indices = @transform_6, window_bounds = array<i64: 1, 64>}, {pipeline_mode = #tpu.pipeline_mode<synchronous>, transform_indices = @transform_7, window_bounds = array<i64: 64, 128>}, {pipeline_mode = #tpu.pipeline_mode<synchronous>, transform_indices = @transform_8, window_bounds = array<i64: 1, 128>}, {transform_indices = @transform_9, window_bounds = array<i64: 8, 128>}]} {
    %c0 = arith.constant 0 : index
    %c0_0 = arith.constant 0 : index
    %0 = vector.load %arg1[%c0, %c0_0] : memref<8x32xf32, #tpu.memory_space<vmem>>, vector<8x32xf32>
    %c0_1 = arith.constant 0 : index
    %c0_2 = arith.constant 0 : index
    %1 = vector.load %arg2[%c0_1, %c0_2] : memref<32x64xf32, #tpu.memory_space<vmem>>, vector<32x64xf32>
    %cst = arith.constant dense<0.000000e+00> : vector<8x64xf32>
    %2 = tpu.matmul %0, %1, %cst {dimension_numbers = #tpu.dot_dimension_numbers<[1], [0], [0], [1], [0, 0, 1, 1], [], []>} : vector<8x32xf32>, vector<32x64xf32>, vector<8x64xf32> -> vector<8x64xf32>
    %c0_3 = arith.constant 0 : index
    %c0_4 = arith.constant 0 : index
    %3 = vector.load %arg3[%c0_3, %c0_4] : memref<1x64xf32, #tpu.memory_space<vmem>>, vector<1x64xf32>
    %4 = vector.broadcast %3 : vector<1x64xf32> to vector<8x64xf32>
    %5 = arith.addf %2, %4 : vector<8x64xf32>
    %cst_5 = arith.constant 0.000000e+00 : f32
    %6 = vector.broadcast %cst_5 : f32 to vector<8x64xf32>
    %7 = arith.maximumf %5, %6 : vector<8x64xf32>
    %c0_6 = arith.constant 0 : index
    %c0_7 = arith.constant 0 : index
    %8 = vector.load %arg4[%c0_6, %c0_7] : memref<64x128xf32, #tpu.memory_space<vmem>>, vector<64x128xf32>
    %cst_8 = arith.constant dense<0.000000e+00> : vector<8x128xf32>
    %9 = tpu.matmul %7, %8, %cst_8 {dimension_numbers = #tpu.dot_dimension_numbers<[1], [0], [0], [1], [0, 0, 1, 1], [], []>} : vector<8x64xf32>, vector<64x128xf32>, vector<8x128xf32> -> vector<8x128xf32>
    %c0_9 = arith.constant 0 : index
    %c0_10 = arith.constant 0 : index
    %10 = vector.load %arg5[%c0_9, %c0_10] : memref<1x128xf32, #tpu.memory_space<vmem>>, vector<1x128xf32>
    %11 = vector.broadcast %10 : vector<1x128xf32> to vector<8x128xf32>
    %12 = arith.addf %9, %11 : vector<8x128xf32>
    %cst_11 = arith.constant 0.000000e+00 : f32
    %13 = vector.broadcast %cst_11 : f32 to vector<8x128xf32>
    %14 = arith.maximumf %12, %13 : vector<8x128xf32>
    %c0_12 = arith.constant 0 : index
    %c0_13 = arith.constant 0 : index
    %15 = vector.load %arg6[%c0_12, %c0_13] : memref<128x64xf32, #tpu.memory_space<vmem>>, vector<128x64xf32>
    %cst_14 = arith.constant dense<0.000000e+00> : vector<8x64xf32>
    %16 = tpu.matmul %14, %15, %cst_14 {dimension_numbers = #tpu.dot_dimension_numbers<[1], [0], [0], [1], [0, 0, 1, 1], [], []>} : vector<8x128xf32>, vector<128x64xf32>, vector<8x64xf32> -> vector<8x64xf32>
    %c0_15 = arith.constant 0 : index
    %c0_16 = arith.constant 0 : index
    %17 = vector.load %arg7[%c0_15, %c0_16] : memref<1x64xf32, #tpu.memory_space<vmem>>, vector<1x64xf32>
    %18 = vector.broadcast %17 : vector<1x64xf32> to vector<8x64xf32>
    %19 = arith.addf %16, %18 : vector<8x64xf32>
    %cst_17 = arith.constant 0.000000e+00 : f32
    %20 = vector.broadcast %cst_17 : f32 to vector<8x64xf32>
    %21 = arith.maximumf %19, %20 : vector<8x64xf32>
    %c0_18 = arith.constant 0 : index
    %c0_19 = arith.constant 0 : index
    %22 = vector.load %arg8[%c0_18, %c0_19] : memref<64x128xf32, #tpu.memory_space<vmem>>, vector<64x128xf32>
    %cst_20 = arith.constant dense<0.000000e+00> : vector<8x128xf32>
    %23 = tpu.matmul %21, %22, %cst_20 {dimension_numbers = #tpu.dot_dimension_numbers<[1], [0], [0], [1], [0, 0, 1, 1], [], []>} : vector<8x64xf32>, vector<64x128xf32>, vector<8x128xf32> -> vector<8x128xf32>
    %c0_21 = arith.constant 0 : index
    %c0_22 = arith.constant 0 : index
    %24 = vector.load %arg9[%c0_21, %c0_22] : memref<1x128xf32, #tpu.memory_space<vmem>>, vector<1x128xf32>
    %25 = vector.broadcast %24 : vector<1x128xf32> to vector<8x128xf32>
    %26 = arith.addf %23, %25 : vector<8x128xf32>
    %c0_23 = arith.constant 0 : index
    %c0_24 = arith.constant 0 : index
    %27 = vector.load %arg10[%c0_23, %c0_24] : memref<8x128xf32, #tpu.memory_space<vmem>>, vector<8x128xf32>
    tpu.vector_store %arg10[%c0_23, %c0_24], %26 {strides = array<i32>} : memref<8x128xf32, #tpu.memory_space<vmem>>, vector<8x128xf32>,
    return
  }
  func.func @transform_0(%arg0: i32) -> (i32, i32) {
    %c0_i32 = arith.constant 0 : i32
    %c0_i32_0 = arith.constant 0 : i32
    return %arg0, %c0_i32 : i32, i32
  }
  func.func @transform_1(%arg0: i32) -> (i32, i32) {
    %c0_i32 = arith.constant 0 : i32
    %c0_i32_0 = arith.constant 0 : i32
    %c0_i32_1 = arith.constant 0 : i32
    return %c0_i32, %c0_i32_0 : i32, i32
  }
  func.func @transform_2(%arg0: i32) -> (i32, i32) {
    %c0_i32 = arith.constant 0 : i32
    %c0_i32_0 = arith.constant 0 : i32
    %c0_i32_1 = arith.constant 0 : i32
    return %c0_i32, %c0_i32_0 : i32, i32
  }
  func.func @transform_3(%arg0: i32) -> (i32, i32) {
    %c0_i32 = arith.constant 0 : i32
    %c0_i32_0 = arith.constant 0 : i32
    %c0_i32_1 = arith.constant 0 : i32
    return %c0_i32, %c0_i32_0 : i32, i32
  }
  func.func @transform_4(%arg0: i32) -> (i32, i32) {
    %c0_i32 = arith.constant 0 : i32
    %c0_i32_0 = arith.constant 0 : i32
    %c0_i32_1 = arith.constant 0 : i32
    return %c0_i32, %c0_i32_0 : i32, i32
  }
  func.func @transform_5(%arg0: i32) -> (i32, i32) {
    %c0_i32 = arith.constant 0 : i32
    %c0_i32_0 = arith.constant 0 : i32
    %c0_i32_1 = arith.constant 0 : i32
    return %c0_i32, %c0_i32_0 : i32, i32
  }
  func.func @transform_6(%arg0: i32) -> (i32, i32) {
    %c0_i32 = arith.constant 0 : i32
    %c0_i32_0 = arith.constant 0 : i32
    %c0_i32_1 = arith.constant 0 : i32
    return %c0_i32, %c0_i32_0 : i32, i32
  }
  func.func @transform_7(%arg0: i32) -> (i32, i32) {
    %c0_i32 = arith.constant 0 : i32
    %c0_i32_0 = arith.constant 0 : i32
    %c0_i32_1 = arith.constant 0 : i32
    return %c0_i32, %c0_i32_0 : i32, i32
  }
  func.func @transform_8(%arg0: i32) -> (i32, i32) {
    %c0_i32 = arith.constant 0 : i32
    %c0_i32_0 = arith.constant 0 : i32
    %c0_i32_1 = arith.constant 0 : i32
    return %c0_i32, %c0_i32_0 : i32, i32
  }
  func.func @transform_9(%arg0: i32) -> (i32, i32) {
    %c0_i32 = arith.constant 0 : i32
    %c0_i32_0 = arith.constant 0 : i32
    return %arg0, %c0_i32 : i32, i32
  }
}

</mosaic_0001>

<llo_original>
// kernel: tpu_custom_call.1
$region0: #{tpu_custom_call.1}
  #allocation0 [shape = 'u32[]', space=smem, size = 0x4, offset = 0x4, fixed_abs, tag = 'smem constant byte address 0x4 - core index']
  #allocation1 [shape = 'u32[144,128]{1,0:T(1,128)}', space=vmem, size = 0x12000, scoped, tag = 'internal scratch']
  %s0 = inlined_call_operand.vmem [shape: f32[8,32], index: 0, kind: input, shape index: {}]
  %s1 = inlined_call_operand.vmem [shape: f32[32,64], index: 1, kind: input, shape index: {}]
  %s2 = inlined_call_operand.vmem [shape: f32[1,64], index: 2, kind: input, shape index: {}]
  %s3 = inlined_call_operand.vmem [shape: f32[64,128], index: 3, kind: input, shape index: {}]
  %s4 = inlined_call_operand.vmem [shape: f32[1,128], index: 4, kind: input, shape index: {}]
  %s5 = inlined_call_operand.vmem [shape: f32[128,64], index: 5, kind: input, shape index: {}]
  %s6 = inlined_call_operand.vmem [shape: f32[1,64], index: 6, kind: input, shape index: {}]
  %s7 = inlined_call_operand.vmem [shape: f32[64,128], index: 7, kind: input, shape index: {}]
  %s8 = inlined_call_operand.vmem [shape: f32[1,128], index: 8, kind: input, shape index: {}]
  %s9 = inlined_call_operand.hbm [shape: f32[8,128], index: 9, kind: output, shape index: {}]
  %s10 = sld [smem:[#allocation0]]
  $region46: #{tpu_custom_call.1} parent=0
    _
  %s12 = ssub.s32 1, %s10
  %s13 = scalar_select 0, %s12, %s10
  $region1: #{tpu_custom_call.1} parent=0
    #allocation2 [shape = 'u8[4096]{0}', space=vmem, size = 0x1000, scoped, tag = 'output window, operand 0, single buffered']
    #allocation3 [shape = 's32[1]{0}', space=sflag, size = 0x4, scoped, tag = 'scoped memory for tpu_custom_call.1']
    %14 = vsyncpa [#allocation3], 0
    // Predicated region
    $region2: #{tpu_custom_call.1} parent=1 // pred_check
      _
    $region3: #{tpu_custom_call.1} parent=1 // pred_check_branch
      %16 = sbr.rel (0) target = $region5
    $region4: #{tpu_custom_call.1} parent=1 // pred_region
      _
    $region5: #{tpu_custom_call.1} parent=1 // pred_fallthru
      _
    // Predicated region
    $region6: #{tpu_custom_call.1} parent=1 // pred_check
      _
    $region7: #{tpu_custom_call.1} parent=1 // pred_check_branch
      %18 = sbr.rel (0) target = $region9
    $region8: #{tpu_custom_call.1} parent=1 // pred_region
      _
    $region9: #{tpu_custom_call.1} parent=1 // pred_fallthru
      _
    // Predicated region
    $region10: #{tpu_custom_call.1} parent=1 // pred_check
      _
    $region11: #{tpu_custom_call.1} parent=1 // pred_check_branch
      %20 = sbr.rel (0) target = $region13
    $region12: #{tpu_custom_call.1} parent=1 // pred_region
      _
    $region13: #{tpu_custom_call.1} parent=1 // pred_fallthru
      _
    // Predicated region
    $region14: #{tpu_custom_call.1} parent=1 // pred_check
      _
    $region15: #{tpu_custom_call.1} parent=1 // pred_check_branch
      %22 = sbr.rel (0) target = $region17
    $region16: #{tpu_custom_call.1} parent=1 // pred_region
      _
    $region17: #{tpu_custom_call.1} parent=1 // pred_fallthru
      _
    // Predicated region
    $region18: #{tpu_custom_call.1} parent=1 // pred_check
      _
    $region19: #{tpu_custom_call.1} parent=1 // pred_check_branch
      %24 = sbr.rel (0) target = $region21
    $region20: #{tpu_custom_call.1} parent=1 // pred_region
      _
    $region21: #{tpu_custom_call.1} parent=1 // pred_fallthru
      _
    // Predicated region
    $region22: #{tpu_custom_call.1} parent=1 // pred_check
      _
    $region23: #{tpu_custom_call.1} parent=1 // pred_check_branch
      %26 = sbr.rel (0) target = $region25
    $region24: #{tpu_custom_call.1} parent=1 // pred_region
      _
    $region25: #{tpu_custom_call.1} parent=1 // pred_fallthru
      _
    // Predicated region
    $region26: #{tpu_custom_call.1} parent=1 // pred_check
      _
    $region27: #{tpu_custom_call.1} parent=1 // pred_check_branch
      %28 = sbr.rel (0) target = $region29
    $region28: #{tpu_custom_call.1} parent=1 // pred_region
      _
    $region29: #{tpu_custom_call.1} parent=1 // pred_fallthru
      _
    // Predicated region
    $region30: #{tpu_custom_call.1} parent=1 // pred_check
      _
    $region31: #{tpu_custom_call.1} parent=1 // pred_check_branch
      %30 = sbr.rel (0) target = $region33
    $region32: #{tpu_custom_call.1} parent=1 // pred_region
      _
    $region33: #{tpu_custom_call.1} parent=1 // pred_fallthru
      _
    // Predicated region
    $region34: #{tpu_custom_call.1} parent=1 // pred_check
      _
    $region35: #{tpu_custom_call.1} parent=1 // pred_check_branch
      %32 = sbr.rel (0) target = $region37
    $region36: #{tpu_custom_call.1} parent=1 // pred_region
      _
    $region37: #{tpu_custom_call.1} parent=1 // pred_fallthru
      _
    %v33 = vld [vmem:[%s0] sm:$0xff]
    %v34 = vld [vmem:[%s1] sm:$0xff]
    %v35 = vld [vmem:[%s1 + $0x8] sm:$0xff]
    %v36 = vld [vmem:[%s1 + $0x10] sm:$0xff]
    %v37 = vld [vmem:[%s1 + $0x18] sm:$0xff]
    %v38 = vld [vmem:[%s2] sm:$0x1]
    %v40 = vlaneseq
    %v41 = vshrl.u32 %v40, 7
    %v42 = vsub.s32 0, %v41
    %v43 = vrot.slane %v38, %v42
    %vm45 = vcmask 261120
    %v47 = vsel %vm45, %v33, 0
    %49 = vmatprep.subr.mxu0 0.0
    %50 = vmatpush1.msra.mxu0 0.0
    %51 = vmatprep.subr.mxu0 0.0
    %52 = vmatpush1.msra.mxu0 0.0
    %53 = vmatprep.subr.mxu0 0.0
    %54 = vmatpush1.msra.mxu0 0.0
    %55 = vmatprep.subr.mxu0 0.0
    %56 = vmatpush1.msra.mxu0 0.0
    %57 = vmatprep.subr.mxu0 0.0
    %58 = vmatpush1.msra.mxu0 0.0
    %59 = vmatprep.subr.mxu0 0.0
    %60 = vmatpush1.msra.mxu0 0.0
    %61 = vmatprep.subr.mxu0 0.0
    %62 = vmatpush1.msra.mxu0 0.0
    %63 = vmatprep.subr.mxu0 0.0
    %64 = vmatpush1.msra.mxu0 0.0
    %65 = vmatprep.subr.mxu0 0.0
    %66 = vmatpush1.msra.mxu0 0.0
    %67 = vmatprep.subr.mxu0 0.0
    %68 = vmatpush1.msra.mxu0 0.0
    %69 = vmatprep.subr.mxu0 0.0
    %70 = vmatpush1.msra.mxu0 0.0
    %71 = vmatprep.subr.mxu0 0.0
    %72 = vmatpush1.msra.mxu0 0.0
    %73 = vmatprep.subr.mxu0 0.0
    %74 = vmatpush1.msra.mxu0 %v37
    %75 = vmatprep.subr.mxu0 0.0
    %76 = vmatpush1.msra.mxu0 %v36
    %77 = vmatprep.subr.mxu0 0.0
    %78 = vmatpush1.msra.mxu0 %v35
    %79 = vmatprep.subr.mxu0 0.0
    %80 = vmatpush1.msra.mxu0 %v34
    %81 = vmatprep.subr.mxu0 0.0
    %82 = vmatpush2.msra.mxu0 0.0
    %83 = vmatprep.subr.mxu0 0.0
    %84 = vmatpush2.msra.mxu0 0.0
    %85 = vmatprep.subr.mxu0 0.0
    %86 = vmatpush2.msra.mxu0 0.0
    %87 = vmatprep.subr.mxu0 0.0
    %88 = vmatpush2.msra.mxu0 0.0
    %89 = vmatprep.subr.mxu0 0.0
    %90 = vmatpush2.msra.mxu0 0.0
    %91 = vmatprep.subr.mxu0 0.0
    %92 = vmatpush2.msra.mxu0 0.0
    %93 = vmatprep.subr.mxu0 0.0
    %94 = vmatpush2.msra.mxu0 0.0
    %95 = vmatprep.subr.mxu0 0.0
    %96 = vmatpush2.msra.mxu0 0.0
    %97 = vmatprep.subr.mxu0 0.0
    %98 = vmatpush2.msra.mxu0 0.0
    %99 = vmatprep.subr.mxu0 0.0
    %100 = vmatpush2.msra.mxu0 0.0
    %101 = vmatprep.subr.mxu0 0.0
    %102 = vmatpush2.msra.mxu0 0.0
    %103 = vmatprep.subr.mxu0 0.0
    %104 = vmatpush2.msra.mxu0 0.0
    %105 = vmatprep.subr.mxu0 0.0
    %106 = vmatpush2.msra.mxu0 0.0
    %107 = vmatprep.subr.mxu0 0.0
    %108 = vmatpush2.msra.mxu0 0.0
    %109 = vmatprep.subr.mxu0 0.0
    %110 = vmatpush2.msra.mxu0 0.0
    %111 = vmatprep.subr.mxu0 0.0
    %112 = vmatpush2.msra.mxu0 0.0
    %113 = vmatprep.mubr.f32.mxu0 0.0
    %114 = vmatmul.mubr.f32.gmra.mxu0 %v47
    %v115 = vpop.f32.mrf.mxu0
    %v116 = vadd.f32 %v43, %v115
    %v117 = vpop.f32.mrf.mxu0
    %118 = vdwg.mxu0
    %v119 = vmax.f32 %v116, 0.0
    %v120 = vld [vmem:[%s3] sm:$0xff]
    %v121 = vld [vmem:[%s3 + $0x8] sm:$0xff]
    %v122 = vld [vmem:[%s3 + $0x10] sm:$0xff]
    %v123 = vld [vmem:[%s3 + $0x18] sm:$0xff]
    %v124 = vld [vmem:[%s3 + $0x20] sm:$0xff]
    %v125 = vld [vmem:[%s3 + $0x28] sm:$0xff]
    %v126 = vld [vmem:[%s3 + $0x30] sm:$0xff]
    %v127 = vld [vmem:[%s3 + $0x38] sm:$0xff]
    %v128 = vld [vmem:[%s4] sm:$0x1]
    %v130 = vlaneseq
    %v131 = vshrl.u32 %v130, 7
    %v132 = vsub.s32 0, %v131
    %v133 = vrot.slane %v128, %v132
    %vm135 = vcmask 523264
    %v137 = vsel %vm135, %v119, 0
    %139 = vmatprep.subr.mxu0 0.0
    %140 = vmatpush1.msra.mxu0 0.0
    %141 = vmatprep.subr.mxu0 0.0
    %142 = vmatpush1.msra.mxu0 0.0
    %143 = vmatprep.subr.mxu0 0.0
    %144 = vmatpush1.msra.mxu0 0.0
    %145 = vmatprep.subr.mxu0 0.0
    %146 = vmatpush1.msra.mxu0 0.0
    %147 = vmatprep.subr.mxu0 0.0
    %148 = vmatpush1.msra.mxu0 0.0
    %149 = vmatprep.subr.mxu0 0.0
    %150 = vmatpush1.msra.mxu0 0.0
    %151 = vmatprep.subr.mxu0 0.0
    %152 = vmatpush1.msra.mxu0 0.0
    %153 = vmatprep.subr.mxu0 0.0
    %154 = vmatpush1.msra.mxu0 0.0
    %155 = vmatprep.subr.mxu0 0.0
    %156 = vmatpush1.msra.mxu0 %v127
    %157 = vmatprep.subr.mxu0 0.0
    %158 = vmatpush1.msra.mxu0 %v126
    %159 = vmatprep.subr.mxu0 0.0
    %160 = vmatpush1.msra.mxu0 %v125
    %161 = vmatprep.subr.mxu0 0.0
    %162 = vmatpush1.msra.mxu0 %v124
    %163 = vmatprep.subr.mxu0 0.0
    %164 = vmatpush1.msra.mxu0 %v123
    %165 = vmatprep.subr.mxu0 0.0
    %166 = vmatpush1.msra.mxu0 %v122
    %167 = vmatprep.subr.mxu0 0.0
    %168 = vmatpush1.msra.mxu0 %v121
    %169 = vmatprep.subr.mxu0 0.0
    %170 = vmatpush1.msra.mxu0 %v120
    %171 = vmatprep.subr.mxu0 0.0
    %172 = vmatpush2.msra.mxu0 0.0
    %173 = vmatprep.subr.mxu0 0.0
    %174 = vmatpush2.msra.mxu0 0.0
    %175 = vmatprep.subr.mxu0 0.0
    %176 = vmatpush2.msra.mxu0 0.0
    %177 = vmatprep.subr.mxu0 0.0
    %178 = vmatpush2.msra.mxu0 0.0
    %179 = vmatprep.subr.mxu0 0.0
    %180 = vmatpush2.msra.mxu0 0.0
    %181 = vmatprep.subr.mxu0 0.0
    %182 = vmatpush2.msra.mxu0 0.0
    %183 = vmatprep.subr.mxu0 0.0
    %184 = vmatpush2.msra.mxu0 0.0
    %185 = vmatprep.subr.mxu0 0.0
    %186 = vmatpush2.msra.mxu0 0.0
    %187 = vmatprep.subr.mxu0 0.0
    %188 = vmatpush2.msra.mxu0 0.0
    %189 = vmatprep.subr.mxu0 0.0
    %190 = vmatpush2.msra.mxu0 0.0
    %191 = vmatprep.subr.mxu0 0.0
    %192 = vmatpush2.msra.mxu0 0.0
    %193 = vmatprep.subr.mxu0 0.0
    %194 = vmatpush2.msra.mxu0 0.0
    %195 = vmatprep.subr.mxu0 0.0
    %196 = vmatpush2.msra.mxu0 0.0
    %197 = vmatprep.subr.mxu0 0.0
    %198 = vmatpush2.msra.mxu0 0.0
    %199 = vmatprep.subr.mxu0 0.0
    %200 = vmatpush2.msra.mxu0 0.0
    %201 = vmatprep.subr.mxu0 0.0
    %202 = vmatpush2.msra.mxu0 0.0
    %203 = vmatprep.mubr.f32.mxu0 0.0
    %204 = vmatmul.mubr.f32.gmra.mxu0 %v137
    %v205 = vpop.f32.mrf.mxu0
    %v206 = vadd.f32 %v133, %v205
    %v207 = vpop.f32.mrf.mxu0
    %208 = vdwg.mxu0
    %v209 = vmax.f32 %v206, 0.0
    %v210 = vld [vmem:[%s5] sm:$0xff]
    %v211 = vld [vmem:[%s5 + $0x8] sm:$0xff]
    %v212 = vld [vmem:[%s5 + $0x10] sm:$0xff]
    %v213 = vld [vmem:[%s5 + $0x18] sm:$0xff]
    %v214 = vld [vmem:[%s5 + $0x20] sm:$0xff]
    %v215 = vld [vmem:[%s5 + $0x28] sm:$0xff]
    %v216 = vld [vmem:[%s5 + $0x30] sm:$0xff]
    %v217 = vld [vmem:[%s5 + $0x38] sm:$0xff]
    %v218 = vld [vmem:[%s5 + $0x40] sm:$0xff]
    %v219 = vld [vmem:[%s5 + $0x48] sm:$0xff]
    %v220 = vld [vmem:[%s5 + $0x50] sm:$0xff]
    %v221 = vld [vmem:[%s5 + $0x58] sm:$0xff]
    %v222 = vld [vmem:[%s5 + $0x60] sm:$0xff]
    %v223 = vld [vmem:[%s5 + $0x68] sm:$0xff]
    %v224 = vld [vmem:[%s5 + $0x70] sm:$0xff]
    %v225 = vld [vmem:[%s5 + $0x78] sm:$0xff]
    %v226 = vld [vmem:[%s6] sm:$0x1]
    %v228 = vlaneseq
    %v229 = vshrl.u32 %v228, 7
    %v230 = vsub.s32 0, %v229
    %v231 = vrot.slane %v226, %v230
    %233 = vmatprep.subr.mxu0 0.0
    %234 = vmatpush1.msra.mxu0 %v225
    %235 = vmatprep.subr.mxu0 0.0
    %236 = vmatpush1.msra.mxu0 %v224
    %237 = vmatprep.subr.mxu0 0.0
    %238 = vmatpush1.msra.mxu0 %v223
    %239 = vmatprep.subr.mxu0 0.0
    %240 = vmatpush1.msra.mxu0 %v222
    %241 = vmatprep.subr.mxu0 0.0
    %242 = vmatpush1.msra.mxu0 %v221
    %243 = vmatprep.subr.mxu0 0.0
    %244 = vmatpush1.msra.mxu0 %v220
    %245 = vmatprep.subr.mxu0 0.0
    %246 = vmatpush1.msra.mxu0 %v219
    %247 = vmatprep.subr.mxu0 0.0
    %248 = vmatpush1.msra.mxu0 %v218
    %249 = vmatprep.subr.mxu0 0.0
    %250 = vmatpush1.msra.mxu0 %v217
    %251 = vmatprep.subr.mxu0 0.0
    %252 = vmatpush1.msra.mxu0 %v216
    %253 = vmatprep.subr.mxu0 0.0
    %254 = vmatpush1.msra.mxu0 %v215
    %255 = vmatprep.subr.mxu0 0.0
    %256 = vmatpush1.msra.mxu0 %v214
    %257 = vmatprep.subr.mxu0 0.0
    %258 = vmatpush1.msra.mxu0 %v213
    %259 = vmatprep.subr.mxu0 0.0
    %260 = vmatpush1.msra.mxu0 %v212
    %261 = vmatprep.subr.mxu0 0.0
    %262 = vmatpush1.msra.mxu0 %v211
    %263 = vmatprep.subr.mxu0 0.0
    %264 = vmatpush1.msra.mxu0 %v210
    %265 = vmatprep.subr.mxu0 0.0
    %266 = vmatpush2.msra.mxu0 0.0
    %267 = vmatprep.subr.mxu0 0.0
    %268 = vmatpush2.msra.mxu0 0.0
    %269 = vmatprep.subr.mxu0 0.0
    %270 = vmatpush2.msra.mxu0 0.0
    %271 = vmatprep.subr.mxu0 0.0
    %272 = vmatpush2.msra.mxu0 0.0
    %273 = vmatprep.subr.mxu0 0.0
    %274 = vmatpush2.msra.mxu0 0.0
    %275 = vmatprep.subr.mxu0 0.0
    %276 = vmatpush2.msra.mxu0 0.0
    %277 = vmatprep.subr.mxu0 0.0
    %278 = vmatpush2.msra.mxu0 0.0
    %279 = vmatprep.subr.mxu0 0.0
    %280 = vmatpush2.msra.mxu0 0.0
    %281 = vmatprep.subr.mxu0 0.0
    %282 = vmatpush2.msra.mxu0 0.0
    %283 = vmatprep.subr.mxu0 0.0
    %284 = vmatpush2.msra.mxu0 0.0
    %285 = vmatprep.subr.mxu0 0.0
    %286 = vmatpush2.msra.mxu0 0.0
    %287 = vmatprep.subr.mxu0 0.0
    %288 = vmatpush2.msra.mxu0 0.0
    %289 = vmatprep.subr.mxu0 0.0
    %290 = vmatpush2.msra.mxu0 0.0
    %291 = vmatprep.subr.mxu0 0.0
    %292 = vmatpush2.msra.mxu0 0.0
    %293 = vmatprep.subr.mxu0 0.0
    %294 = vmatpush2.msra.mxu0 0.0
    %295 = vmatprep.subr.mxu0 0.0
    %296 = vmatpush2.msra.mxu0 0.0
    %297 = vmatprep.mubr.f32.mxu0 0.0
    %298 = vmatmul.mubr.f32.gmra.mxu0 %v209
    %v299 = vpop.f32.mrf.mxu0
    %v300 = vadd.f32 %v231, %v299
    %v301 = vpop.f32.mrf.mxu0
    %302 = vdwg.mxu0
    %v303 = vmax.f32 %v300, 0.0
    %v304 = vld [vmem:[%s7] sm:$0xff]
    %v305 = vld [vmem:[%s7 + $0x8] sm:$0xff]
    %v306 = vld [vmem:[%s7 + $0x10] sm:$0xff]
    %v307 = vld [vmem:[%s7 + $0x18] sm:$0xff]
    %v308 = vld [vmem:[%s7 + $0x20] sm:$0xff]
    %v309 = vld [vmem:[%s7 + $0x28] sm:$0xff]
    %v310 = vld [vmem:[%s7 + $0x30] sm:$0xff]
    %v311 = vld [vmem:[%s7 + $0x38] sm:$0xff]
    %v312 = vld [vmem:[%s8] sm:$0x1]
    %v314 = vlaneseq
    %v315 = vshrl.u32 %v314, 7
    %v316 = vsub.s32 0, %v315
    %v317 = vrot.slane %v312, %v316
    %v320 = vsel %vm135, %v303, 0
    %322 = vmatprep.subr.mxu0 0.0
    %323 = vmatpush1.msra.mxu0 0.0
    %324 = vmatprep.subr.mxu0 0.0
    %325 = vmatpush1.msra.mxu0 0.0
    %326 = vmatprep.subr.mxu0 0.0
    %327 = vmatpush1.msra.mxu0 0.0
    %328 = vmatprep.subr.mxu0 0.0
    %329 = vmatpush1.msra.mxu0 0.0
    %330 = vmatprep.subr.mxu0 0.0
    %331 = vmatpush1.msra.mxu0 0.0
    %332 = vmatprep.subr.mxu0 0.0
    %333 = vmatpush1.msra.mxu0 0.0
    %334 = vmatprep.subr.mxu0 0.0
    %335 = vmatpush1.msra.mxu0 0.0
    %336 = vmatprep.subr.mxu0 0.0
    %337 = vmatpush1.msra.mxu0 0.0
    %338 = vmatprep.subr.mxu0 0.0
    %339 = vmatpush1.msra.mxu0 %v311
    %340 = vmatprep.subr.mxu0 0.0
    %341 = vmatpush1.msra.mxu0 %v310
    %342 = vmatprep.subr.mxu0 0.0
    %343 = vmatpush1.msra.mxu0 %v309
    %344 = vmatprep.subr.mxu0 0.0
    %345 = vmatpush1.msra.mxu0 %v308
    %346 = vmatprep.subr.mxu0 0.0
    %347 = vmatpush1.msra.mxu0 %v307
    %348 = vmatprep.subr.mxu0 0.0
    %349 = vmatpush1.msra.mxu0 %v306
    %350 = vmatprep.subr.mxu0 0.0
    %351 = vmatpush1.msra.mxu0 %v305
    %352 = vmatprep.subr.mxu0 0.0
    %353 = vmatpush1.msra.mxu0 %v304
    %354 = vmatprep.subr.mxu0 0.0
    %355 = vmatpush2.msra.mxu0 0.0
    %356 = vmatprep.subr.mxu0 0.0
    %357 = vmatpush2.msra.mxu0 0.0
    %358 = vmatprep.subr.mxu0 0.0
    %359 = vmatpush2.msra.mxu0 0.0
    %360 = vmatprep.subr.mxu0 0.0
    %361 = vmatpush2.msra.mxu0 0.0
    %362 = vmatprep.subr.mxu0 0.0
    %363 = vmatpush2.msra.mxu0 0.0
    %364 = vmatprep.subr.mxu0 0.0
    %365 = vmatpush2.msra.mxu0 0.0
    %366 = vmatprep.subr.mxu0 0.0
    %367 = vmatpush2.msra.mxu0 0.0
    %368 = vmatprep.subr.mxu0 0.0
    %369 = vmatpush2.msra.mxu0 0.0
    %370 = vmatprep.subr.mxu0 0.0
    %371 = vmatpush2.msra.mxu0 0.0
    %372 = vmatprep.subr.mxu0 0.0
    %373 = vmatpush2.msra.mxu0 0.0
    %374 = vmatprep.subr.mxu0 0.0
    %375 = vmatpush2.msra.mxu0 0.0
    %376 = vmatprep.subr.mxu0 0.0
    %377 = vmatpush2.msra.mxu0 0.0
    %378 = vmatprep.subr.mxu0 0.0
    %379 = vmatpush2.msra.mxu0 0.0
    %380 = vmatprep.subr.mxu0 0.0
    %381 = vmatpush2.msra.mxu0 0.0
    %382 = vmatprep.subr.mxu0 0.0
    %383 = vmatpush2.msra.mxu0 0.0
    %384 = vmatprep.subr.mxu0 0.0
    %385 = vmatpush2.msra.mxu0 0.0
    %386 = vmatprep.mubr.f32.mxu0 0.0
    %387 = vmatmul.mubr.f32.gmra.mxu0 %v320
    %v388 = vpop.f32.mrf.mxu0
    %v389 = vadd.f32 %v317, %v388
    %v390 = vpop.f32.mrf.mxu0
    %391 = vdwg.mxu0
    %392 = vst [vmem:[#allocation2] sm:$0xff] %v389
    // Predicated region
    $region38: #{tpu_custom_call.1} parent=1 // pred_check
      _
    $region39: #{tpu_custom_call.1} parent=1 // pred_check_branch
      %394 = sbr.rel (0) target = $region41
    $region40: #{tpu_custom_call.1} parent=1 // pred_region
      %s396 = ssub.s32 128, 128
      %397 = vsyncadd [#allocation3], %s396
      %s399 = sshll.u32 [#allocation2], 4
      %s400 = int_to_ptr.vmem [resolvable:$true] %s399
      %402 = dma.vmem_to_hbm [thread:$0]  %s400, 128, %s9, [#allocation3]
    $region41: #{tpu_custom_call.1} parent=1 // pred_fallthru
      _
    // Predicated region
    $region42: #{tpu_custom_call.1} parent=1 // pred_check
      _
    $region43: #{tpu_custom_call.1} parent=1 // pred_check_branch
      %404 = sbr.rel (0) target = $region45
    $region44: #{tpu_custom_call.1} parent=1 // pred_region
      %405 = dma.done [#allocation3], 128
    $region45: #{tpu_custom_call.1} parent=1 // pred_fallthru
      _
    %406 = vsyncpa [#allocation3], 1

</llo_original>
